<compile_context>
chip_gen: v6e
topology: v6e:2x2x1
jax: 0.10.0
libtpu: 0.0.40
codegen_flags: <defaults>
</compile_context>

<pallas_src>
import functools

import jax
import jax.numpy as jnp
from jax.experimental import pallas as pl
from jax.experimental.pallas import tpu as pltpu


def _leaky_relu(x, negative_slope=0.01):
    # F.leaky_relu default negative_slope = 0.01
    return jnp.where(x > 0, x, negative_slope * x)


def reward_net_kernel(x_ref,
                      w1_ref, b1_ref,
                      w2_ref, b2_ref,
                      w3_ref, b3_ref,
                      w4_ref, b4_ref,
                      o_ref,
                      *, negative_network_output: bool):
    # x_ref : (d_in, TB)                 -- batch on the 128-lane axis
    # w{1,2,3}_ref : (out_feat, in_feat) -- i.e. W^T of the PyTorch layer
    # b{1,2,3}_ref : (out_feat, 1)
    # w4_ref : (H, 1), b4_ref : (1, 1)
    x = x_ref[...]

    h = jnp.dot(w1_ref[...], x, preferred_element_type=jnp.float32) + b1_ref[...]
    h = _leaky_relu(h)                                              # (H, TB)

    h = jnp.dot(w2_ref[...], h, preferred_element_type=jnp.float32) + b2_ref[...]
    h = _leaky_relu(h)

    h = jnp.dot(w3_ref[...], h, preferred_element_type=jnp.float32) + b3_ref[...]
    h = _leaky_relu(h)

    # Layer 4 has a single output feature: VPU multiply + sublane reduce
    # instead of an almost-entirely-padded MXU pass.
    y = jnp.sum(h * w4_ref[...], axis=0, keepdims=True) + b4_ref[...]   # (1, TB)
    y = jnp.tanh(y)

    if negative_network_output:
        y = (y - 1.0) * 0.5

    o_ref[...] = y.astype(o_ref.dtype)


def _reward_net_forward(x, params, *, negative_network_output: bool,
                        block_b: int = 1024):
    """x: (B, num_inputs) float32 -> (B, 1) float32."""
    B, d_in = x.shape
    w1, b1, w2, b2, w3, b3, w4, b4 = params
    H = w1.shape[1]

    # ---- layout plumbing (weights are tiny; x.T is one cheap XLA transpose) --
    # Batch-on-lanes layout: weights as (out, in), biases as (out, 1),
    # input transposed to (d_in, B).
    w1t, w2t, w3t = w1.T, w2.T, w3.T            # (H, d_in), (H, H), (H, H)
    b1c, b2c, b3c = b1.T, b2.T, b3.T            # (H, 1)
    x_t = x.T                                   # (d_in, B)

    # ---- batch tiling (no padding copy: partial last block is masked) -------
    tb = B if B <= block_b else block_b         # full-dim block or 128-multiple
    num_tiles = int(pl.cdiv(B, tb))

    kernel = functools.partial(
        reward_net_kernel, negative_network_output=negative_network_output)

    # Weights / biases: same block every step -> VMEM-resident across iters.
    resident = lambda shape: pl.BlockSpec(shape, lambda i: (0, 0))

    out_t = pl.pallas_call(
        kernel,
        out_shape=jax.ShapeDtypeStruct((1, B), jnp.float32),
        grid=(num_tiles,),
        in_specs=[
            pl.BlockSpec((d_in, tb), lambda i: (0, i)),   # batch tile
            resident((H, d_in)), resident((H, 1)),
            resident((H, H)),    resident((H, 1)),
            resident((H, H)),    resident((H, 1)),
            resident((H, 1)),    resident((1, 1)),
        ],
        out_specs=pl.BlockSpec((1, tb), lambda i: (0, i)),
        compiler_params=pltpu.CompilerParams(
            dimension_semantics=("parallel",)),   # megacore sharding on v7x
    )(x_t, w1t, b1c, w2t, b2c, w3t, b3c, w4, b4)

    # (1, B) row-major is the same element order as (B, 1): metadata reshape.
    return out_t.reshape(B, 1)


# Jit the wrapper so the transpose / reshape plumbing dispatches together
# with the kernel.
reward_net_forward = jax.jit(
    _reward_net_forward, static_argnames=("negative_network_output", "block_b"))


def init_params(key, num_inputs, hidden_dim):
    """Deterministic init matching nn.Linear's U(-1/sqrt(fan_in), 1/sqrt(fan_in))."""
    def linear(key, fan_in, fan_out):
        kw, kb = jax.random.split(key)
        bound = 1.0 / jnp.sqrt(fan_in)
        w = jax.random.uniform(kw, (fan_in, fan_out), jnp.float32, -bound, bound)
        b = jax.random.uniform(kb, (1, fan_out), jnp.float32, -bound, bound)
        return w, b

    k1, k2, k3, k4 = jax.random.split(key, 4)
    w1, b1 = linear(k1, num_inputs, hidden_dim)
    w2, b2 = linear(k2, hidden_dim, hidden_dim)
    w3, b3 = linear(k3, hidden_dim, hidden_dim)
    w4, b4 = linear(k4, hidden_dim, 1)
    return (w1, b1, w2, b2, w3, b3, w4, b4)


def reference_forward(x, params, *, negative_network_output: bool):
    w1, b1, w2, b2, w3, b3, w4, b4 = params
    h = _leaky_relu(x @ w1 + b1)
    h = _leaky_relu(h @ w2 + b2)
    h = _leaky_relu(h @ w3 + b3)
    y = jnp.tanh(h @ w4 + b4)
    return (y - 1.0) / 2.0 if negative_network_output else y


if __name__ == "__main__":
    num_inputs = 16
    hidden_dim = 32
    negative_network_output = True

    key = jax.random.PRNGKey(0)
    k_params, k_small, k_large = jax.random.split(key, 3)
    params = init_params(k_params, num_inputs, hidden_dim)

    # Small shape consistent with the module (single-tile path).
    batch = 8
    x = jax.random.normal(k_small, (batch, num_inputs), jnp.float32)
    out = reward_net_forward(
        x, params, negative_network_output=negative_network_output)
    out = jax.block_until_ready(out)
    ref = reference_forward(
        x, params, negative_network_output=negative_network_output)
    assert out.shape == (batch, 1)
    assert jnp.allclose(out, ref, atol=1e-5, rtol=1e-5)

    # Larger batch: exercises the multi-tile grid with a partial (masked)
    # last block and the negative_network_output=False branch.
    big_batch = 2176  # = 2*1024 + 128 -> grid of 3, last block partial
    xb = jax.random.normal(k_large, (big_batch, num_inputs), jnp.float32)
    outb = reward_net_forward(xb, params, negative_network_output=False)
    outb = jax.block_until_ready(outb)
    refb = reference_forward(xb, params, negative_network_output=False)
    assert outb.shape == (big_batch, 1)
    assert jnp.allclose(outb, refb, atol=1e-5, rtol=1e-5)

    print("KERNEL_OK")
</pallas_src>

<mosaic_0001>
module attributes {stable_mosaic.version = 11 : i64} {
  func.func @reward_net_kernel(%arg0: i32, %arg1: memref<16x8xf32, #tpu.memory_space<vmem>>, %arg2: memref<32x16xf32, #tpu.memory_space<vmem>>, %arg3: memref<32x1xf32, #tpu.memory_space<vmem>>, %arg4: memref<32x32xf32, #tpu.memory_space<vmem>>, %arg5: memref<32x1xf32, #tpu.memory_space<vmem>>, %arg6: memref<32x32xf32, #tpu.memory_space<vmem>>, %arg7: memref<32x1xf32, #tpu.memory_space<vmem>>, %arg8: memref<32x1xf32, #tpu.memory_space<vmem>>, %arg9: memref<1x1xf32, #tpu.memory_space<vmem>>, %arg10: memref<1x8xf32, #tpu.memory_space<vmem>>) attributes {dimension_semantics = [#tpu.dimension_semantics<parallel>], iteration_bounds = array<i64: 1>, scalar_prefetch = 0 : i64, scratch_operands = 0 : i64, tpu.core_type = #tpu.core_type<tc>, window_params = [{transform_indices = @transform_0, window_bounds = array<i64: 16, 8>}, {pipeline_mode = #tpu.pipeline_mode<synchronous>, transform_indices = @transform_1, window_bounds = array<i64: 32, 16>}, {pipeline_mode = #tpu.pipeline_mode<synchronous>, transform_indices = @transform_2, window_bounds = array<i64: 32, 1>}, {pipeline_mode = #tpu.pipeline_mode<synchronous>, transform_indices = @transform_3, window_bounds = array<i64: 32, 32>}, {pipeline_mode = #tpu.pipeline_mode<synchronous>, transform_indices = @transform_4, window_bounds = array<i64: 32, 1>}, {pipeline_mode = #tpu.pipeline_mode<synchronous>, transform_indices = @transform_5, window_bounds = array<i64: 32, 32>}, {pipeline_mode = #tpu.pipeline_mode<synchronous>, transform_indices = @transform_6, window_bounds = array<i64: 32, 1>}, {pipeline_mode = #tpu.pipeline_mode<synchronous>, transform_indices = @transform_7, window_bounds = array<i64: 32, 1>}, {pipeline_mode = #tpu.pipeline_mode<synchronous>, transform_indices = @transform_8, window_bounds = array<i64: 1, 1>}, {transform_indices = @transform_9, window_bounds = array<i64: 1, 8>}]} {
    %c0 = arith.constant 0 : index
    %c0_0 = arith.constant 0 : index
    %0 = vector.load %arg1[%c0, %c0_0] : memref<16x8xf32, #tpu.memory_space<vmem>>, vector<16x8xf32>
    %c0_1 = arith.constant 0 : index
    %c0_2 = arith.constant 0 : index
    %1 = vector.load %arg2[%c0_1, %c0_2] : memref<32x16xf32, #tpu.memory_space<vmem>>, vector<32x16xf32>
    %cst = arith.constant dense<0.000000e+00> : vector<32x8xf32>
    %2 = tpu.matmul %1, %0, %cst {dimension_numbers = #tpu.dot_dimension_numbers<[1], [0], [0], [1], [0, 0, 1, 1], [], []>} : vector<32x16xf32>, vector<16x8xf32>, vector<32x8xf32> -> vector<32x8xf32>
    %c0_3 = arith.constant 0 : index
    %c0_4 = arith.constant 0 : index
    %3 = vector.load %arg3[%c0_3, %c0_4] : memref<32x1xf32, #tpu.memory_space<vmem>>, vector<32x1xf32>
    %4 = vector.broadcast %3 : vector<32x1xf32> to vector<32x8xf32>
    %5 = arith.addf %2, %4 : vector<32x8xf32>
    %cst_5 = arith.constant 0.000000e+00 : f32
    %6 = vector.broadcast %cst_5 : f32 to vector<32x8xf32>
    %7 = arith.cmpf ogt, %5, %6 : vector<32x8xf32>
    %cst_6 = arith.constant 0.00999999977 : f32
    %8 = vector.broadcast %cst_6 : f32 to vector<32x8xf32>
    %9 = arith.mulf %8, %5 : vector<32x8xf32>
    %10 = arith.select %7, %5, %9 : vector<32x8xi1>, vector<32x8xf32>
    %c0_7 = arith.constant 0 : index
    %c0_8 = arith.constant 0 : index
    %11 = vector.load %arg4[%c0_7, %c0_8] : memref<32x32xf32, #tpu.memory_space<vmem>>, vector<32x32xf32>
    %cst_9 = arith.constant dense<0.000000e+00> : vector<32x8xf32>
    %12 = tpu.matmul %11, %10, %cst_9 {dimension_numbers = #tpu.dot_dimension_numbers<[1], [0], [0], [1], [0, 0, 1, 1], [], []>} : vector<32x32xf32>, vector<32x8xf32>, vector<32x8xf32> -> vector<32x8xf32>
    %c0_10 = arith.constant 0 : index
    %c0_11 = arith.constant 0 : index
    %13 = vector.load %arg5[%c0_10, %c0_11] : memref<32x1xf32, #tpu.memory_space<vmem>>, vector<32x1xf32>
    %14 = vector.broadcast %13 : vector<32x1xf32> to vector<32x8xf32>
    %15 = arith.addf %12, %14 : vector<32x8xf32>
    %cst_12 = arith.constant 0.000000e+00 : f32
    %16 = vector.broadcast %cst_12 : f32 to vector<32x8xf32>
    %17 = arith.cmpf ogt, %15, %16 : vector<32x8xf32>
    %cst_13 = arith.constant 0.00999999977 : f32
    %18 = vector.broadcast %cst_13 : f32 to vector<32x8xf32>
    %19 = arith.mulf %18, %15 : vector<32x8xf32>
    %20 = arith.select %17, %15, %19 : vector<32x8xi1>, vector<32x8xf32>
    %c0_14 = arith.constant 0 : index
    %c0_15 = arith.constant 0 : index
    %21 = vector.load %arg6[%c0_14, %c0_15] : memref<32x32xf32, #tpu.memory_space<vmem>>, vector<32x32xf32>
    %cst_16 = arith.constant dense<0.000000e+00> : vector<32x8xf32>
    %22 = tpu.matmul %21, %20, %cst_16 {dimension_numbers = #tpu.dot_dimension_numbers<[1], [0], [0], [1], [0, 0, 1, 1], [], []>} : vector<32x32xf32>, vector<32x8xf32>, vector<32x8xf32> -> vector<32x8xf32>
    %c0_17 = arith.constant 0 : index
    %c0_18 = arith.constant 0 : index
    %23 = vector.load %arg7[%c0_17, %c0_18] : memref<32x1xf32, #tpu.memory_space<vmem>>, vector<32x1xf32>
    %24 = vector.broadcast %23 : vector<32x1xf32> to vector<32x8xf32>
    %25 = arith.addf %22, %24 : vector<32x8xf32>
    %cst_19 = arith.constant 0.000000e+00 : f32
    %26 = vector.broadcast %cst_19 : f32 to vector<32x8xf32>
    %27 = arith.cmpf ogt, %25, %26 : vector<32x8xf32>
    %cst_20 = arith.constant 0.00999999977 : f32
    %28 = vector.broadcast %cst_20 : f32 to vector<32x8xf32>
    %29 = arith.mulf %28, %25 : vector<32x8xf32>
    %30 = arith.select %27, %25, %29 : vector<32x8xi1>, vector<32x8xf32>
    %c0_21 = arith.constant 0 : index
    %c0_22 = arith.constant 0 : index
    %31 = vector.load %arg8[%c0_21, %c0_22] : memref<32x1xf32, #tpu.memory_space<vmem>>, vector<32x1xf32>
    %32 = vector.broadcast %31 : vector<32x1xf32> to vector<32x8xf32>
    %33 = arith.mulf %30, %32 : vector<32x8xf32>
    %cst_23 = arith.constant dense<0.000000e+00> : vector<8xf32>
    %34 = vector.multi_reduction <add>, %33, %cst_23 [0] : vector<32x8xf32> to vector<8xf32>
    %35 = vector.shape_cast %34 : vector<8xf32> to vector<1x8xf32>
    %c0_24 = arith.constant 0 : index
    %c0_25 = arith.constant 0 : index
    %36 = vector.load %arg9[%c0_24, %c0_25] : memref<1x1xf32, #tpu.memory_space<vmem>>, vector<1x1xf32>
    %37 = vector.broadcast %36 : vector<1x1xf32> to vector<1x8xf32>
    %38 = arith.addf %35, %37 : vector<1x8xf32>
    %39 = math.tanh %38 : vector<1x8xf32>
    %cst_26 = arith.constant 1.000000e+00 : f32
    %40 = vector.broadcast %cst_26 : f32 to vector<1x8xf32>
    %41 = arith.subf %39, %40 : vector<1x8xf32>
    %cst_27 = arith.constant 5.000000e-01 : f32
    %42 = vector.broadcast %cst_27 : f32 to vector<1x8xf32>
    %43 = arith.mulf %41, %42 : vector<1x8xf32>
    %c0_28 = arith.constant 0 : index
    %c0_29 = arith.constant 0 : index
    %44 = vector.load %arg10[%c0_28, %c0_29] : memref<1x8xf32, #tpu.memory_space<vmem>>, vector<1x8xf32>
    tpu.vector_store %arg10[%c0_28, %c0_29], %43 {strides = array<i32>} : memref<1x8xf32, #tpu.memory_space<vmem>>, vector<1x8xf32>,
    return
  }
  func.func @transform_0(%arg0: i32) -> (i32, i32) {
    %c0_i32 = arith.constant 0 : i32
    %c0_i32_0 = arith.constant 0 : i32
    return %c0_i32, %arg0 : i32, i32
  }
  func.func @transform_1(%arg0: i32) -> (i32, i32) {
    %c0_i32 = arith.constant 0 : i32
    %c0_i32_0 = arith.constant 0 : i32
    %c0_i32_1 = arith.constant 0 : i32
    return %c0_i32, %c0_i32_0 : i32, i32
  }
  func.func @transform_2(%arg0: i32) -> (i32, i32) {
    %c0_i32 = arith.constant 0 : i32
    %c0_i32_0 = arith.constant 0 : i32
    %c0_i32_1 = arith.constant 0 : i32
    return %c0_i32, %c0_i32_0 : i32, i32
  }
  func.func @transform_3(%arg0: i32) -> (i32, i32) {
    %c0_i32 = arith.constant 0 : i32
    %c0_i32_0 = arith.constant 0 : i32
    %c0_i32_1 = arith.constant 0 : i32
    return %c0_i32, %c0_i32_0 : i32, i32
  }
  func.func @transform_4(%arg0: i32) -> (i32, i32) {
    %c0_i32 = arith.constant 0 : i32
    %c0_i32_0 = arith.constant 0 : i32
    %c0_i32_1 = arith.constant 0 : i32
    return %c0_i32, %c0_i32_0 : i32, i32
  }
  func.func @transform_5(%arg0: i32) -> (i32, i32) {
    %c0_i32 = arith.constant 0 : i32
    %c0_i32_0 = arith.constant 0 : i32
    %c0_i32_1 = arith.constant 0 : i32
    return %c0_i32, %c0_i32_0 : i32, i32
  }
  func.func @transform_6(%arg0: i32) -> (i32, i32) {
    %c0_i32 = arith.constant 0 : i32
    %c0_i32_0 = arith.constant 0 : i32
    %c0_i32_1 = arith.constant 0 : i32
    return %c0_i32, %c0_i32_0 : i32, i32
  }
  func.func @transform_7(%arg0: i32) -> (i32, i32) {
    %c0_i32 = arith.constant 0 : i32
    %c0_i32_0 = arith.constant 0 : i32
    %c0_i32_1 = arith.constant 0 : i32
    return %c0_i32, %c0_i32_0 : i32, i32
  }
  func.func @transform_8(%arg0: i32) -> (i32, i32) {
    %c0_i32 = arith.constant 0 : i32
    %c0_i32_0 = arith.constant 0 : i32
    %c0_i32_1 = arith.constant 0 : i32
    return %c0_i32, %c0_i32_0 : i32, i32
  }
  func.func @transform_9(%arg0: i32) -> (i32, i32) {
    %c0_i32 = arith.constant 0 : i32
    %c0_i32_0 = arith.constant 0 : i32
    return %c0_i32, %arg0 : i32, i32
  }
}

</mosaic_0001>

<llo_original>
// kernel: _reward_net_forward.1
$region0: #{_reward_net_forward.1}
  #allocation0 [shape = 'u32[]', space=smem, size = 0x4, offset = 0x4, fixed_abs, tag = 'smem constant byte address 0x4 - core index']
  #allocation1 [shape = 'u32[144,128]{1,0:T(1,128)}', space=vmem, size = 0x12000, scoped, tag = 'internal scratch']
  #allocation2 [shape = 'f32[1,1]{1,0:T(1,128)S(1)}', space=vmem, size = 0x200, scoped, tag = 'scoped memory for _reward_net_forward.1']
  %s0 = inlined_call_operand.vmem [shape: f32[16,8], index: 0, kind: input, shape index: {}]
  %s1 = inlined_call_operand.vmem [shape: f32[32,16], index: 1, kind: input, shape index: {}]
  %s2 = inlined_call_operand.vmem [shape: f32[32,1], index: 2, kind: input, shape index: {}]
  %s3 = inlined_call_operand.vmem [shape: f32[32,32], index: 3, kind: input, shape index: {}]
  %s4 = inlined_call_operand.vmem [shape: f32[32,1], index: 4, kind: input, shape index: {}]
  %s5 = inlined_call_operand.vmem [shape: f32[32,32], index: 5, kind: input, shape index: {}]
  %s6 = inlined_call_operand.vmem [shape: f32[32,1], index: 6, kind: input, shape index: {}]
  %s7 = inlined_call_operand.vmem [shape: f32[32,1], index: 7, kind: input, shape index: {}]
  %s8 = inlined_call_operand.<no memory space> [shape: f32[1,1], index: 8, kind: input, shape index: {}]
  %s9 = inlined_call_operand.hbm [shape: f32[1,8], index: 9, kind: output, shape index: {}]
  %s10 = sld [smem:[#allocation0]]
  $region46: #{_reward_net_forward.1} parent=0
    _
  %s12 = ssub.s32 1, %s10
  %s13 = scalar_select 0, %s12, %s10
  %v14 = vstv %s8
  %15 = vst [vmem:[#allocation2] sm:$0x1] %v14
  $region1: #{_reward_net_forward.1} parent=0
    #allocation3 [shape = 'u8[512]{0}', space=vmem, size = 0x400, scoped, tag = 'output window, operand 0, single buffered']
    #allocation4 [shape = 's32[1]{0}', space=sflag, size = 0x4, scoped, tag = 'scoped memory for _reward_net_forward.1']
    %16 = vsyncpa [#allocation4], 0
    // Predicated region
    $region2: #{_reward_net_forward.1} parent=1 // pred_check
      _
    $region3: #{_reward_net_forward.1} parent=1 // pred_check_branch
      %18 = sbr.rel (0) target = $region5
    $region4: #{_reward_net_forward.1} parent=1 // pred_region
      _
    $region5: #{_reward_net_forward.1} parent=1 // pred_fallthru
      _
    // Predicated region
    $region6: #{_reward_net_forward.1} parent=1 // pred_check
      _
    $region7: #{_reward_net_forward.1} parent=1 // pred_check_branch
      %20 = sbr.rel (0) target = $region9
    $region8: #{_reward_net_forward.1} parent=1 // pred_region
      _
    $region9: #{_reward_net_forward.1} parent=1 // pred_fallthru
      _
    // Predicated region
    $region10: #{_reward_net_forward.1} parent=1 // pred_check
      _
    $region11: #{_reward_net_forward.1} parent=1 // pred_check_branch
      %22 = sbr.rel (0) target = $region13
    $region12: #{_reward_net_forward.1} parent=1 // pred_region
      _
    $region13: #{_reward_net_forward.1} parent=1 // pred_fallthru
      _
    // Predicated region
    $region14: #{_reward_net_forward.1} parent=1 // pred_check
      _
    $region15: #{_reward_net_forward.1} parent=1 // pred_check_branch
      %24 = sbr.rel (0) target = $region17
    $region16: #{_reward_net_forward.1} parent=1 // pred_region
      _
    $region17: #{_reward_net_forward.1} parent=1 // pred_fallthru
      _
    // Predicated region
    $region18: #{_reward_net_forward.1} parent=1 // pred_check
      _
    $region19: #{_reward_net_forward.1} parent=1 // pred_check_branch
      %26 = sbr.rel (0) target = $region21
    $region20: #{_reward_net_forward.1} parent=1 // pred_region
      _
    $region21: #{_reward_net_forward.1} parent=1 // pred_fallthru
      _
    // Predicated region
    $region22: #{_reward_net_forward.1} parent=1 // pred_check
      _
    $region23: #{_reward_net_forward.1} parent=1 // pred_check_branch
      %28 = sbr.rel (0) target = $region25
    $region24: #{_reward_net_forward.1} parent=1 // pred_region
      _
    $region25: #{_reward_net_forward.1} parent=1 // pred_fallthru
      _
    // Predicated region
    $region26: #{_reward_net_forward.1} parent=1 // pred_check
      _
    $region27: #{_reward_net_forward.1} parent=1 // pred_check_branch
      %30 = sbr.rel (0) target = $region29
    $region28: #{_reward_net_forward.1} parent=1 // pred_region
      _
    $region29: #{_reward_net_forward.1} parent=1 // pred_fallthru
      _
    // Predicated region
    $region30: #{_reward_net_forward.1} parent=1 // pred_check
      _
    $region31: #{_reward_net_forward.1} parent=1 // pred_check_branch
      %32 = sbr.rel (0) target = $region33
    $region32: #{_reward_net_forward.1} parent=1 // pred_region
      _
    $region33: #{_reward_net_forward.1} parent=1 // pred_fallthru
      _
    // Predicated region
    $region34: #{_reward_net_forward.1} parent=1 // pred_check
      _
    $region35: #{_reward_net_forward.1} parent=1 // pred_check_branch
      %34 = sbr.rel (0) target = $region37
    $region36: #{_reward_net_forward.1} parent=1 // pred_region
      _
    $region37: #{_reward_net_forward.1} parent=1 // pred_fallthru
      _
    %v35 = vld [vmem:[%s0] sm:$0xff]
    %v36 = vld [vmem:[%s0 + $0x8] sm:$0xff]
    %v37 = vld [vmem:[%s1] sm:$0xff]
    %v38 = vld [vmem:[%s1 + $0x8] sm:$0xff]
    %v39 = vld [vmem:[%s1 + $0x10] sm:$0xff]
    %v40 = vld [vmem:[%s1 + $0x18] sm:$0xff]
    %v41 = vld [vmem:[%s2] sm:$0xff]
    %v42 = vld [vmem:[%s2 + $0x8] sm:$0xff]
    %v43 = vld [vmem:[%s2 + $0x10] sm:$0xff]
    %v44 = vld [vmem:[%s2 + $0x18] sm:$0xff]
    %46 = vset.pattern.permute.xlu0 0
    %47 = vperm.xlu0 %46, %v41
    %v48 = vpop.permute.xlu0 %47
    %51 = vset.pattern.permute.xlu0 0
    %52 = vperm.xlu0 %51, %v42
    %v53 = vpop.permute.xlu0 %52
    %56 = vset.pattern.permute.xlu0 0
    %57 = vperm.xlu0 %56, %v43
    %v58 = vpop.permute.xlu0 %57
    %61 = vset.pattern.permute.xlu0 0
    %62 = vperm.xlu0 %61, %v44
    %v63 = vpop.permute.xlu0 %62
    %vm65 = vcmask 130048
    %v67 = vsel %vm65, %v37, 0
    %v70 = vsel %vm65, %v38, 0
    %v73 = vsel %vm65, %v39, 0
    %v76 = vsel %vm65, %v40, 0
    %78 = vmatprep.subr.mxu0 0.0
    %79 = vmatpush1.msra.mxu0 0.0
    %80 = vmatprep.subr.mxu0 0.0
    %81 = vmatpush1.msra.mxu0 0.0
    %82 = vmatprep.subr.mxu0 0.0
    %83 = vmatpush1.msra.mxu0 0.0
    %84 = vmatprep.subr.mxu0 0.0
    %85 = vmatpush1.msra.mxu0 0.0
    %86 = vmatprep.subr.mxu0 0.0
    %87 = vmatpush1.msra.mxu0 0.0
    %88 = vmatprep.subr.mxu0 0.0
    %89 = vmatpush1.msra.mxu0 0.0
    %90 = vmatprep.subr.mxu0 0.0
    %91 = vmatpush1.msra.mxu0 0.0
    %92 = vmatprep.subr.mxu0 0.0
    %93 = vmatpush1.msra.mxu0 0.0
    %94 = vmatprep.subr.mxu0 0.0
    %95 = vmatpush1.msra.mxu0 0.0
    %96 = vmatprep.subr.mxu0 0.0
    %97 = vmatpush1.msra.mxu0 0.0
    %98 = vmatprep.subr.mxu0 0.0
    %99 = vmatpush1.msra.mxu0 0.0
    %100 = vmatprep.subr.mxu0 0.0
    %101 = vmatpush1.msra.mxu0 0.0
    %102 = vmatprep.subr.mxu0 0.0
    %103 = vmatpush1.msra.mxu0 0.0
    %104 = vmatprep.subr.mxu0 0.0
    %105 = vmatpush1.msra.mxu0 0.0
    %106 = vmatprep.subr.mxu0 0.0
    %107 = vmatpush1.msra.mxu0 %v36
    %108 = vmatprep.subr.mxu0 0.0
    %109 = vmatpush1.msra.mxu0 %v35
    %110 = vmatprep.subr.mxu0 0.0
    %111 = vmatpush2.msra.mxu0 0.0
    %112 = vmatprep.subr.mxu0 0.0
    %113 = vmatpush2.msra.mxu0 0.0
    %114 = vmatprep.subr.mxu0 0.0
    %115 = vmatpush2.msra.mxu0 0.0
    %116 = vmatprep.subr.mxu0 0.0
    %117 = vmatpush2.msra.mxu0 0.0
    %118 = vmatprep.subr.mxu0 0.0
    %119 = vmatpush2.msra.mxu0 0.0
    %120 = vmatprep.subr.mxu0 0.0
    %121 = vmatpush2.msra.mxu0 0.0
    %122 = vmatprep.subr.mxu0 0.0
    %123 = vmatpush2.msra.mxu0 0.0
    %124 = vmatprep.subr.mxu0 0.0
    %125 = vmatpush2.msra.mxu0 0.0
    %126 = vmatprep.subr.mxu0 0.0
    %127 = vmatpush2.msra.mxu0 0.0
    %128 = vmatprep.subr.mxu0 0.0
    %129 = vmatpush2.msra.mxu0 0.0
    %130 = vmatprep.subr.mxu0 0.0
    %131 = vmatpush2.msra.mxu0 0.0
    %132 = vmatprep.subr.mxu0 0.0
    %133 = vmatpush2.msra.mxu0 0.0
    %134 = vmatprep.subr.mxu0 0.0
    %135 = vmatpush2.msra.mxu0 0.0
    %136 = vmatprep.subr.mxu0 0.0
    %137 = vmatpush2.msra.mxu0 0.0
    %138 = vmatprep.subr.mxu0 0.0
    %139 = vmatpush2.msra.mxu0 0.0
    %140 = vmatprep.subr.mxu0 0.0
    %141 = vmatpush2.msra.mxu0 0.0
    %142 = vmatprep.mubr.f32.mxu0 0.0
    %143 = vmatmul.mubr.f32.gmra.mxu0 %v67
    %v144 = vpop.f32.mrf.mxu0
    %v145 = vadd.f32 %v48, %v144
    %v146 = vpop.f32.mrf.mxu0
    %147 = vmatprep.mubr.f32.mxu0 0.0
    %148 = vmatmul.mubr.f32.gmra.mxu0 %v70
    %v149 = vpop.f32.mrf.mxu0
    %v150 = vadd.f32 %v53, %v149
    %v151 = vpop.f32.mrf.mxu0
    %152 = vmatprep.mubr.f32.mxu0 0.0
    %153 = vmatmul.mubr.f32.gmra.mxu0 %v73
    %v154 = vpop.f32.mrf.mxu0
    %v155 = vadd.f32 %v58, %v154
    %v156 = vpop.f32.mrf.mxu0
    %157 = vmatprep.mubr.f32.mxu0 0.0
    %158 = vmatmul.mubr.f32.gmra.mxu0 %v76
    %v159 = vpop.f32.mrf.mxu0
    %v160 = vadd.f32 %v63, %v159
    %v161 = vpop.f32.mrf.mxu0
    %162 = vdwg.mxu0
    %vm163 = vcmp.gt.f32.partialorder %v145, 0.0
    %vm164 = vcmp.gt.f32.partialorder %v150, 0.0
    %vm165 = vcmp.gt.f32.partialorder %v155, 0.0
    %vm166 = vcmp.gt.f32.partialorder %v160, 0.0
    %v167 = vmul.f32 %v145, 0.01
    %v168 = vmul.f32 %v150, 0.01
    %v169 = vmul.f32 %v155, 0.01
    %v170 = vmul.f32 %v160, 0.01
    %v171 = vsel %vm163, %v145, %v167
    %v172 = vsel %vm164, %v150, %v168
    %v173 = vsel %vm165, %v155, %v169
    %v174 = vsel %vm166, %v160, %v170
    %v175 = vld [vmem:[%s3] sm:$0xff]
    %v176 = vld [vmem:[%s3 + $0x8] sm:$0xff]
    %v177 = vld [vmem:[%s3 + $0x10] sm:$0xff]
    %v178 = vld [vmem:[%s3 + $0x18] sm:$0xff]
    %v179 = vld [vmem:[%s4] sm:$0xff]
    %v180 = vld [vmem:[%s4 + $0x8] sm:$0xff]
    %v181 = vld [vmem:[%s4 + $0x10] sm:$0xff]
    %v182 = vld [vmem:[%s4 + $0x18] sm:$0xff]
    %184 = vset.pattern.permute.xlu0 0
    %185 = vperm.xlu0 %184, %v179
    %v186 = vpop.permute.xlu0 %185
    %189 = vset.pattern.permute.xlu0 0
    %190 = vperm.xlu0 %189, %v180
    %v191 = vpop.permute.xlu0 %190
    %194 = vset.pattern.permute.xlu0 0
    %195 = vperm.xlu0 %194, %v181
    %v196 = vpop.permute.xlu0 %195
    %199 = vset.pattern.permute.xlu0 0
    %200 = vperm.xlu0 %199, %v182
    %v201 = vpop.permute.xlu0 %200
    %vm203 = vcmask 261120
    %v205 = vsel %vm203, %v175, 0
    %v208 = vsel %vm203, %v176, 0
    %v211 = vsel %vm203, %v177, 0
    %v214 = vsel %vm203, %v178, 0
    %216 = vmatprep.subr.mxu0 0.0
    %217 = vmatpush1.msra.mxu0 0.0
    %218 = vmatprep.subr.mxu0 0.0
    %219 = vmatpush1.msra.mxu0 0.0
    %220 = vmatprep.subr.mxu0 0.0
    %221 = vmatpush1.msra.mxu0 0.0
    %222 = vmatprep.subr.mxu0 0.0
    %223 = vmatpush1.msra.mxu0 0.0
    %224 = vmatprep.subr.mxu0 0.0
    %225 = vmatpush1.msra.mxu0 0.0
    %226 = vmatprep.subr.mxu0 0.0
    %227 = vmatpush1.msra.mxu0 0.0
    %228 = vmatprep.subr.mxu0 0.0
    %229 = vmatpush1.msra.mxu0 0.0
    %230 = vmatprep.subr.mxu0 0.0
    %231 = vmatpush1.msra.mxu0 0.0
    %232 = vmatprep.subr.mxu0 0.0
    %233 = vmatpush1.msra.mxu0 0.0
    %234 = vmatprep.subr.mxu0 0.0
    %235 = vmatpush1.msra.mxu0 0.0
    %236 = vmatprep.subr.mxu0 0.0
    %237 = vmatpush1.msra.mxu0 0.0
    %238 = vmatprep.subr.mxu0 0.0
    %239 = vmatpush1.msra.mxu0 0.0
    %240 = vmatprep.subr.mxu0 0.0
    %241 = vmatpush1.msra.mxu0 %v174
    %242 = vmatprep.subr.mxu0 0.0
    %243 = vmatpush1.msra.mxu0 %v173
    %244 = vmatprep.subr.mxu0 0.0
    %245 = vmatpush1.msra.mxu0 %v172
    %246 = vmatprep.subr.mxu0 0.0
    %247 = vmatpush1.msra.mxu0 %v171
    %248 = vmatprep.subr.mxu0 0.0
    %249 = vmatpush2.msra.mxu0 0.0
    %250 = vmatprep.subr.mxu0 0.0
    %251 = vmatpush2.msra.mxu0 0.0
    %252 = vmatprep.subr.mxu0 0.0
    %253 = vmatpush2.msra.mxu0 0.0
    %254 = vmatprep.subr.mxu0 0.0
    %255 = vmatpush2.msra.mxu0 0.0
    %256 = vmatprep.subr.mxu0 0.0
    %257 = vmatpush2.msra.mxu0 0.0
    %258 = vmatprep.subr.mxu0 0.0
    %259 = vmatpush2.msra.mxu0 0.0
    %260 = vmatprep.subr.mxu0 0.0
    %261 = vmatpush2.msra.mxu0 0.0
    %262 = vmatprep.subr.mxu0 0.0
    %263 = vmatpush2.msra.mxu0 0.0
    %264 = vmatprep.subr.mxu0 0.0
    %265 = vmatpush2.msra.mxu0 0.0
    %266 = vmatprep.subr.mxu0 0.0
    %267 = vmatpush2.msra.mxu0 0.0
    %268 = vmatprep.subr.mxu0 0.0
    %269 = vmatpush2.msra.mxu0 0.0
    %270 = vmatprep.subr.mxu0 0.0
    %271 = vmatpush2.msra.mxu0 0.0
    %272 = vmatprep.subr.mxu0 0.0
    %273 = vmatpush2.msra.mxu0 0.0
    %274 = vmatprep.subr.mxu0 0.0
    %275 = vmatpush2.msra.mxu0 0.0
    %276 = vmatprep.subr.mxu0 0.0
    %277 = vmatpush2.msra.mxu0 0.0
    %278 = vmatprep.subr.mxu0 0.0
    %279 = vmatpush2.msra.mxu0 0.0
    %280 = vmatprep.mubr.f32.mxu0 0.0
    %281 = vmatmul.mubr.f32.gmra.mxu0 %v205
    %v282 = vpop.f32.mrf.mxu0
    %v283 = vadd.f32 %v186, %v282
    %v284 = vpop.f32.mrf.mxu0
    %285 = vmatprep.mubr.f32.mxu0 0.0
    %286 = vmatmul.mubr.f32.gmra.mxu0 %v208
    %v287 = vpop.f32.mrf.mxu0
    %v288 = vadd.f32 %v191, %v287
    %v289 = vpop.f32.mrf.mxu0
    %290 = vmatprep.mubr.f32.mxu0 0.0
    %291 = vmatmul.mubr.f32.gmra.mxu0 %v211
    %v292 = vpop.f32.mrf.mxu0
    %v293 = vadd.f32 %v196, %v292
    %v294 = vpop.f32.mrf.mxu0
    %295 = vmatprep.mubr.f32.mxu0 0.0
    %296 = vmatmul.mubr.f32.gmra.mxu0 %v214
    %v297 = vpop.f32.mrf.mxu0
    %v298 = vadd.f32 %v201, %v297
    %v299 = vpop.f32.mrf.mxu0
    %300 = vdwg.mxu0
    %vm301 = vcmp.gt.f32.partialorder %v283, 0.0
    %vm302 = vcmp.gt.f32.partialorder %v288, 0.0
    %vm303 = vcmp.gt.f32.partialorder %v293, 0.0
    %vm304 = vcmp.gt.f32.partialorder %v298, 0.0
    %v305 = vmul.f32 %v283, 0.01
    %v306 = vmul.f32 %v288, 0.01
    %v307 = vmul.f32 %v293, 0.01
    %v308 = vmul.f32 %v298, 0.01
    %v309 = vsel %vm301, %v283, %v305
    %v310 = vsel %vm302, %v288, %v306
    %v311 = vsel %vm303, %v293, %v307
    %v312 = vsel %vm304, %v298, %v308
    %v313 = vld [vmem:[%s5] sm:$0xff]
    %v314 = vld [vmem:[%s5 + $0x8] sm:$0xff]
    %v315 = vld [vmem:[%s5 + $0x10] sm:$0xff]
    %v316 = vld [vmem:[%s5 + $0x18] sm:$0xff]
    %v317 = vld [vmem:[%s6] sm:$0xff]
    %v318 = vld [vmem:[%s6 + $0x8] sm:$0xff]
    %v319 = vld [vmem:[%s6 + $0x10] sm:$0xff]
    %v320 = vld [vmem:[%s6 + $0x18] sm:$0xff]
    %322 = vset.pattern.permute.xlu0 0
    %323 = vperm.xlu0 %322, %v317
    %v324 = vpop.permute.xlu0 %323
    %327 = vset.pattern.permute.xlu0 0
    %328 = vperm.xlu0 %327, %v318
    %v329 = vpop.permute.xlu0 %328
    %332 = vset.pattern.permute.xlu0 0
    %333 = vperm.xlu0 %332, %v319
    %v334 = vpop.permute.xlu0 %333
    %337 = vset.pattern.permute.xlu0 0
    %338 = vperm.xlu0 %337, %v320
    %v339 = vpop.permute.xlu0 %338
    %v342 = vsel %vm203, %v313, 0
    %v345 = vsel %vm203, %v314, 0
    %v348 = vsel %vm203, %v315, 0
    %v351 = vsel %vm203, %v316, 0
    %353 = vmatprep.subr.mxu0 0.0
    %354 = vmatpush1.msra.mxu0 0.0
    %355 = vmatprep.subr.mxu0 0.0
    %356 = vmatpush1.msra.mxu0 0.0
    %357 = vmatprep.subr.mxu0 0.0
    %358 = vmatpush1.msra.mxu0 0.0
    %359 = vmatprep.subr.mxu0 0.0
    %360 = vmatpush1.msra.mxu0 0.0
    %361 = vmatprep.subr.mxu0 0.0
    %362 = vmatpush1.msra.mxu0 0.0
    %363 = vmatprep.subr.mxu0 0.0
    %364 = vmatpush1.msra.mxu0 0.0
    %365 = vmatprep.subr.mxu0 0.0
    %366 = vmatpush1.msra.mxu0 0.0
    %367 = vmatprep.subr.mxu0 0.0
    %368 = vmatpush1.msra.mxu0 0.0
    %369 = vmatprep.subr.mxu0 0.0
    %370 = vmatpush1.msra.mxu0 0.0
    %371 = vmatprep.subr.mxu0 0.0
    %372 = vmatpush1.msra.mxu0 0.0
    %373 = vmatprep.subr.mxu0 0.0
    %374 = vmatpush1.msra.mxu0 0.0
    %375 = vmatprep.subr.mxu0 0.0
    %376 = vmatpush1.msra.mxu0 0.0
    %377 = vmatprep.subr.mxu0 0.0
    %378 = vmatpush1.msra.mxu0 %v312
    %379 = vmatprep.subr.mxu0 0.0
    %380 = vmatpush1.msra.mxu0 %v311
    %381 = vmatprep.subr.mxu0 0.0
    %382 = vmatpush1.msra.mxu0 %v310
    %383 = vmatprep.subr.mxu0 0.0
    %384 = vmatpush1.msra.mxu0 %v309
    %385 = vmatprep.subr.mxu0 0.0
    %386 = vmatpush2.msra.mxu0 0.0
    %387 = vmatprep.subr.mxu0 0.0
    %388 = vmatpush2.msra.mxu0 0.0
    %389 = vmatprep.subr.mxu0 0.0
    %390 = vmatpush2.msra.mxu0 0.0
    %391 = vmatprep.subr.mxu0 0.0
    %392 = vmatpush2.msra.mxu0 0.0
    %393 = vmatprep.subr.mxu0 0.0
    %394 = vmatpush2.msra.mxu0 0.0
    %395 = vmatprep.subr.mxu0 0.0
    %396 = vmatpush2.msra.mxu0 0.0
    %397 = vmatprep.subr.mxu0 0.0
    %398 = vmatpush2.msra.mxu0 0.0
    %399 = vmatprep.subr.mxu0 0.0
    %400 = vmatpush2.msra.mxu0 0.0
    %401 = vmatprep.subr.mxu0 0.0
    %402 = vmatpush2.msra.mxu0 0.0
    %403 = vmatprep.subr.mxu0 0.0
    %404 = vmatpush2.msra.mxu0 0.0
    %405 = vmatprep.subr.mxu0 0.0
    %406 = vmatpush2.msra.mxu0 0.0
    %407 = vmatprep.subr.mxu0 0.0
    %408 = vmatpush2.msra.mxu0 0.0
    %409 = vmatprep.subr.mxu0 0.0
    %410 = vmatpush2.msra.mxu0 0.0
    %411 = vmatprep.subr.mxu0 0.0
    %412 = vmatpush2.msra.mxu0 0.0
    %413 = vmatprep.subr.mxu0 0.0
    %414 = vmatpush2.msra.mxu0 0.0
    %415 = vmatprep.subr.mxu0 0.0
    %416 = vmatpush2.msra.mxu0 0.0
    %417 = vmatprep.mubr.f32.mxu0 0.0
    %418 = vmatmul.mubr.f32.gmra.mxu0 %v342
    %v419 = vpop.f32.mrf.mxu0
    %v420 = vadd.f32 %v324, %v419
    %v421 = vpop.f32.mrf.mxu0
    %422 = vmatprep.mubr.f32.mxu0 0.0
    %423 = vmatmul.mubr.f32.gmra.mxu0 %v345
    %v424 = vpop.f32.mrf.mxu0
    %v425 = vadd.f32 %v329, %v424
    %v426 = vpop.f32.mrf.mxu0
    %427 = vmatprep.mubr.f32.mxu0 0.0
    %428 = vmatmul.mubr.f32.gmra.mxu0 %v348
    %v429 = vpop.f32.mrf.mxu0
    %v430 = vadd.f32 %v334, %v429
    %v431 = vpop.f32.mrf.mxu0
    %432 = vmatprep.mubr.f32.mxu0 0.0
    %433 = vmatmul.mubr.f32.gmra.mxu0 %v351
    %v434 = vpop.f32.mrf.mxu0
    %v435 = vadd.f32 %v339, %v434
    %v436 = vpop.f32.mrf.mxu0
    %437 = vdwg.mxu0
    %vm438 = vcmp.gt.f32.partialorder %v420, 0.0
    %vm439 = vcmp.gt.f32.partialorder %v425, 0.0
    %vm440 = vcmp.gt.f32.partialorder %v430, 0.0
    %vm441 = vcmp.gt.f32.partialorder %v435, 0.0
    %v442 = vmul.f32 %v420, 0.01
    %v443 = vmul.f32 %v425, 0.01
    %v444 = vmul.f32 %v430, 0.01
    %v445 = vmul.f32 %v435, 0.01
    %v446 = vsel %vm438, %v420, %v442
    %v447 = vsel %vm439, %v425, %v443
    %v448 = vsel %vm440, %v430, %v444
    %v449 = vsel %vm441, %v435, %v445
    %v450 = vld [vmem:[%s7] sm:$0xff]
    %v451 = vld [vmem:[%s7 + $0x8] sm:$0xff]
    %v452 = vld [vmem:[%s7 + $0x10] sm:$0xff]
    %v453 = vld [vmem:[%s7 + $0x18] sm:$0xff]
    %455 = vset.pattern.permute.xlu0 0
    %456 = vperm.xlu0 %455, %v450
    %v457 = vpop.permute.xlu0 %456
    %460 = vset.pattern.permute.xlu0 0
    %461 = vperm.xlu0 %460, %v451
    %v462 = vpop.permute.xlu0 %461
    %465 = vset.pattern.permute.xlu0 0
    %466 = vperm.xlu0 %465, %v452
    %v467 = vpop.permute.xlu0 %466
    %470 = vset.pattern.permute.xlu0 0
    %471 = vperm.xlu0 %470, %v453
    %v472 = vpop.permute.xlu0 %471
    %v474 = vmul.f32 %v446, %v457
    %v475 = vmul.f32 %v447, %v462
    %v476 = vmul.f32 %v448, %v467
    %v477 = vmul.f32 %v449, %v472
    %vm478 = vcmask 64512
    %v479 = vsel %vm478, %v474, 0.0
    %v480 = vsel %vm478, %v475, 0.0
    %v481 = vadd.f32 %v479, %v480
    %v482 = vsel %vm478, %v476, 0.0
    %v483 = vadd.f32 %v481, %v482
    %v484 = vsel %vm478, %v477, 0.0
    %v485 = vadd.f32 %v483, %v484
    %v486 = vrot.slane %v485, 4
    %v487 = vadd.f32 %v485, %v486
    %v488 = vrot.slane %v487, 2
    %v489 = vadd.f32 %v487, %v488
    %v490 = vrot.slane %v489, 1
    %v491 = vadd.f32 %v489, %v490
    %v492 = vld [vmem:[#allocation2] sm:$0x1]
    %494 = vset.pattern.permute.xlu0 0
    %495 = vperm.xlu0 %494, %v492
    %v496 = vpop.permute.xlu0 %495
    %v498 = vlaneseq
    %v499 = vshrl.u32 %v498, 7
    %v500 = vsub.s32 0, %v499
    %v501 = vrot.slane %v496, %v500
    %v502 = vadd.f32 %v491, %v501
    %v503 = vtanh.pop %v502
    %v504 = vsub.f32 %v503, 1.0
    %v505 = vmul.f32 %v504, 0.5
    %vm506 = vcmask 57344
    %507 = vst.msk [vmem:[#allocation3] sm:$0x1] %vm506, %v505
    // Predicated region
    $region38: #{_reward_net_forward.1} parent=1 // pred_check
      _
    $region39: #{_reward_net_forward.1} parent=1 // pred_check_branch
      %509 = sbr.rel (0) target = $region41
    $region40: #{_reward_net_forward.1} parent=1 // pred_region
      %s511 = ssub.s32 16, 16
      %512 = vsyncadd [#allocation4], %s511
      %s514 = sshll.u32 [#allocation3], 4
      %s515 = int_to_ptr.vmem [resolvable:$true] %s514
      %517 = dma.vmem_to_hbm [thread:$0]  %s515, 16, %s9, [#allocation4]
    $region41: #{_reward_net_forward.1} parent=1 // pred_fallthru
      _
    // Predicated region
    $region42: #{_reward_net_forward.1} parent=1 // pred_check
      _
    $region43: #{_reward_net_forward.1} parent=1 // pred_check_branch
      %519 = sbr.rel (0) target = $region45
    $region44: #{_reward_net_forward.1} parent=1 // pred_region
      %520 = dma.done [#allocation4], 16
    $region45: #{_reward_net_forward.1} parent=1 // pred_fallthru
      _
    %521 = vsyncpa [#allocation4], 1

</llo_original>
